<compile_context>
chip_gen: v6e
topology: v6e:2x2x1
jax: 0.10.0
libtpu: 0.0.40
codegen_flags: <defaults>
</compile_context>

<pallas_src>
import numpy as np
import jax
import jax.numpy as jnp
from jax.experimental import pallas as pl
from jax.experimental.pallas import tpu as pltpu


def _round_up(x, m):
    return ((x + m - 1) // m) * m


def _pick_tile(total, quantum, cap):
    """Pick (tile, padded_total): tile is a multiple of `quantum`, <= `cap`
    (cap must be a multiple of quantum), minimizing padded_total >= total."""
    t_q = _round_up(total, quantum)
    if t_q <= cap:
        return t_q, t_q
    n_tiles = pl.cdiv(t_q, cap)
    tile = _round_up(pl.cdiv(t_q, n_tiles), quantum)
    return tile, n_tiles * tile


# ----------------------------------------------------------------------------
# Kernel 1: input_proj = nn.Conv2d(C_in, d_model, kernel_size=1)
#   channel-major: out[b] = w.T @ x[b]  with x[b] : [C_in, HW]
#   -> output is already NCHW ([d_model, HW]) with spatial on the lane axis.
# ----------------------------------------------------------------------------
def _pointwise_conv_kernel(x_ref, wt_ref, b_ref, o_ref):
    # x_ref : (1, C_in, tn) bf16   wt_ref : (d_model, C_in) bf16
    # b_ref : (d_model, 1) f32     o_ref  : (1, d_model, tn) bf16
    x = x_ref[0]                                                    # [C_in, tn]
    acc = jnp.dot(wt_ref[...], x, preferred_element_type=jnp.float32)
    o_ref[0] = (acc + b_ref[...]).astype(o_ref.dtype)


def input_proj_1x1(x_nchw, w, b, *, tn_max=2048):
    """x_nchw: [B, C_in, H, W]; w: [C_in, d_model]; b: [d_model] -> [B, d_model, H, W] (bf16)."""
    B, C_in, H, W = x_nchw.shape
    d_model = w.shape[1]
    HW = H * W

    tn, HW_pad = _pick_tile(HW, 128, tn_max)      # spatial tile, multiple of 128

    x3 = x_nchw.reshape(B, C_in, HW).astype(jnp.bfloat16)           # free reshape
    if HW_pad != HW:
        x3 = jnp.pad(x3, ((0, 0), (0, 0), (0, HW_pad - HW)))
    wt = jnp.transpose(w).astype(jnp.bfloat16)                      # [d_model, C_in] (tiny)
    b2 = b.reshape(d_model, 1).astype(jnp.float32)

    flops = 2 * B * HW_pad * C_in * d_model
    bytes_accessed = (x3.size * 2 + wt.size * 2 + b2.size * 4
                      + B * d_model * HW_pad * 2)

    out = pl.pallas_call(
        _pointwise_conv_kernel,
        out_shape=jax.ShapeDtypeStruct((B, d_model, HW_pad), jnp.bfloat16),
        grid_spec=pltpu.PrefetchScalarGridSpec(
            num_scalar_prefetch=0,
            grid=(B, HW_pad // tn),
            in_specs=[
                pl.BlockSpec((1, C_in, tn), lambda bb, j: (bb, 0, j)),
                pl.BlockSpec((d_model, C_in), lambda bb, j: (0, 0)),   # resident
                pl.BlockSpec((d_model, 1), lambda bb, j: (0, 0)),      # resident
            ],
            out_specs=pl.BlockSpec((1, d_model, tn), lambda bb, j: (bb, 0, j)),
        ),
        compiler_params=pltpu.CompilerParams(
            dimension_semantics=("parallel", "parallel")),
        cost_estimate=pl.CostEstimate(flops=flops, transcendentals=0,
                                      bytes_accessed=bytes_accessed),
    )(x3, wt, b2)

    # free reshape back to NCHW (matches PyTorch Conv2d output layout)
    return out[:, :, :HW].reshape(B, d_model, H, W)


# ----------------------------------------------------------------------------
# Kernel 2: vocab_embed = MLP(d_model, d_model, num_classes, num_layers=3)
#   (DETR-style: Linear->ReLU->Linear->ReLU->Linear) fused, tiled over tokens.
#   num_classes is zero-padded to 128 lanes for full-width output stores.
# ----------------------------------------------------------------------------
def _mlp3_kernel(x_ref, w1_ref, b1_ref, w2_ref, b2_ref, w3_ref, b3_ref, o_ref):
    h = jnp.dot(x_ref[...], w1_ref[...], preferred_element_type=jnp.float32) + b1_ref[...]
    h = jnp.maximum(h, 0.0).astype(w2_ref.dtype)          # bf16 back into the MXU
    h = jnp.dot(h, w2_ref[...], preferred_element_type=jnp.float32) + b2_ref[...]
    h = jnp.maximum(h, 0.0).astype(w3_ref.dtype)
    o_ref[...] = jnp.dot(h, w3_ref[...], preferred_element_type=jnp.float32) + b3_ref[...]


def vocab_embed_mlp(x, params, *, tile_m_max=512):
    """x: [B, S, d_model] -> [B, S, num_classes] (f32) via fused 3-layer MLP kernel."""
    (w1, b1, w2, b2, w3, b3) = params
    B, S, d_model = x.shape
    num_classes = w3.shape[1]
    M = B * S

    tile_m, M_pad = _pick_tile(M, 8, tile_m_max)
    C_pad = _round_up(num_classes, 128)       # lane-dense final matmul / store

    x2 = x.reshape(M, d_model).astype(jnp.bfloat16)
    if M_pad != M:
        x2 = jnp.pad(x2, ((0, M_pad - M), (0, 0)))

    w1b = w1.astype(jnp.bfloat16)
    w2b = w2.astype(jnp.bfloat16)
    w3b = jnp.pad(w3, ((0, 0), (0, C_pad - num_classes))).astype(jnp.bfloat16)
    b1f = b1.reshape(1, d_model).astype(jnp.float32)
    b2f = b2.reshape(1, d_model).astype(jnp.float32)
    b3f = jnp.pad(b3, (0, C_pad - num_classes)).reshape(1, C_pad).astype(jnp.float32)

    flops = 2 * M_pad * d_model * (d_model + d_model + C_pad)
    bytes_accessed = (x2.size * 2
                      + (w1b.size + w2b.size + w3b.size) * 2
                      + (b1f.size + b2f.size + b3f.size) * 4
                      + M_pad * C_pad * 4)

    out = pl.pallas_call(
        _mlp3_kernel,
        out_shape=jax.ShapeDtypeStruct((M_pad, C_pad), jnp.float32),
        grid_spec=pltpu.PrefetchScalarGridSpec(
            num_scalar_prefetch=0,
            grid=(M_pad // tile_m,),
            in_specs=[
                pl.BlockSpec((tile_m, d_model), lambda i: (i, 0)),
                pl.BlockSpec((d_model, d_model), lambda i: (0, 0)),   # resident weights
                pl.BlockSpec((1, d_model), lambda i: (0, 0)),
                pl.BlockSpec((d_model, d_model), lambda i: (0, 0)),
                pl.BlockSpec((1, d_model), lambda i: (0, 0)),
                pl.BlockSpec((d_model, C_pad), lambda i: (0, 0)),
                pl.BlockSpec((1, C_pad), lambda i: (0, 0)),
            ],
            out_specs=pl.BlockSpec((tile_m, C_pad), lambda i: (i, 0)),
        ),
        compiler_params=pltpu.CompilerParams(dimension_semantics=("parallel",)),
        cost_estimate=pl.CostEstimate(flops=flops, transcendentals=0,
                                      bytes_accessed=bytes_accessed),
    )(x2, w1b, b1f, w2b, b2f, w3b, b3f)

    return out[:M, :num_classes].reshape(B, S, num_classes)


# ----------------------------------------------------------------------------
# SPTS forward (stubs for the externally-supplied backbone / transformer)
# ----------------------------------------------------------------------------
def backbone_stub(samples, d_model):
    # TODO(synk): real SPTS uses a ResNet backbone producing NestedTensor features
    # + sinusoidal positional encodings; here features = input, pos = zeros,
    # mask = all-valid (False), matching the decompose() interface shapes.
    B, C, H, W = samples.shape
    features = samples
    mask = jnp.zeros((B, H, W), dtype=bool)
    pos = jnp.zeros((B, d_model, H, W), dtype=jnp.float32)
    return features, mask, pos


def transformer_stub(src_proj, mask, pos, sequence, vocab_embed_fn):
    # TODO(synk): the DETR-style encoder/decoder transformer is an external module
    # not defined in SPTS; this stub takes the first `seq_len` spatial tokens of
    # the projected features as decoder hidden states and applies the (Pallas)
    # vocab_embed head, which is how the real transformer uses vocab_embed.
    B, d_model, H, W = src_proj.shape
    seq_len = sequence.shape[1]
    # slice first (cheap), then a tiny [B, d, seq] -> [B, seq, d] transpose
    hs = jnp.transpose(src_proj.reshape(B, d_model, H * W)[:, :, :seq_len], (0, 2, 1))
    return vocab_embed_fn(hs)


def spts_forward(samples, sequence, params):
    conv_w, conv_b, mlp_params = params
    d_model = conv_w.shape[1]
    features, mask, pos = backbone_stub(samples, d_model)
    src_proj = input_proj_1x1(features, conv_w, conv_b)          # Pallas kernel 1
    out = transformer_stub(
        src_proj, mask, pos, sequence,
        lambda hs: vocab_embed_mlp(hs, mlp_params),              # Pallas kernel 2
    )
    return out


# ----------------------------------------------------------------------------
# Pure-JAX f32 reference (module semantics) for correctness check
# ----------------------------------------------------------------------------
def spts_forward_ref(samples, sequence, params):
    conv_w, conv_b, (w1, b1, w2, b2, w3, b3) = params
    B, C, H, W = samples.shape
    d_model = conv_w.shape[1]
    seq_len = sequence.shape[1]
    x_tok = jnp.transpose(samples, (0, 2, 3, 1)).reshape(B * H * W, C)
    proj = (x_tok @ conv_w + conv_b).reshape(B, H, W, d_model)
    proj = jnp.transpose(proj, (0, 3, 1, 2))                     # NCHW
    tokens = jnp.transpose(proj.reshape(B, d_model, H * W), (0, 2, 1))[:, :seq_len, :]
    h = jnp.maximum(tokens @ w1 + b1, 0.0)
    h = jnp.maximum(h @ w2 + b2, 0.0)
    return h @ w3 + b3


if __name__ == "__main__":
    # Small shapes consistent with the module.
    B, C_in, H, W = 2, 4, 16, 16          # backbone.num_channels = 4
    d_model = 32                          # transformer.d_model
    num_classes = 10
    seq_len = 8

    key = jax.random.PRNGKey(0)
    kx, ks, k1, k2, k3, k4 = jax.random.split(key, 6)

    samples = jax.random.normal(kx, (B, C_in, H, W), dtype=jnp.float32)
    sequence = jax.random.randint(ks, (B, seq_len), 0, num_classes)

    # Deterministic parameter init (shapes from SPTS.__init__).
    # input_proj: Conv2d(C_in, d_model, 1)  -> weight kept as [C_in, d_model].
    conv_w = jax.random.normal(k1, (C_in, d_model), dtype=jnp.float32) * 0.1
    conv_b = jnp.linspace(-0.1, 0.1, d_model, dtype=jnp.float32)
    # vocab_embed: MLP(d_model, d_model, num_classes, 3)
    w1 = jax.random.normal(k2, (d_model, d_model), dtype=jnp.float32) * 0.1
    b1 = jnp.zeros((d_model,), jnp.float32)
    w2 = jax.random.normal(k3, (d_model, d_model), dtype=jnp.float32) * 0.1
    b2 = jnp.zeros((d_model,), jnp.float32)
    w3 = jax.random.normal(k4, (d_model, num_classes), dtype=jnp.float32) * 0.1
    b3 = jnp.linspace(-0.05, 0.05, num_classes, dtype=jnp.float32)
    params = (conv_w, conv_b, (w1, b1, w2, b2, w3, b3))

    out = spts_forward(samples, sequence, params)
    out = jax.block_until_ready(out)

    ref = spts_forward_ref(samples, sequence, params)
    # bf16 activations/weights with f32 accumulation -> relaxed tolerance.
    np.testing.assert_allclose(np.asarray(out), np.asarray(ref), rtol=2e-2, atol=2e-2)
    assert out.shape == (B, seq_len, num_classes)

    print("KERNEL_OK")
</pallas_src>

<mosaic_0001>
module attributes {stable_mosaic.version = 11 : i64} {
  func.func @_pointwise_conv_kernel(%arg0: i32, %arg1: i32, %arg2: memref<1x4x256xbf16, #tpu.memory_space<vmem>>, %arg3: memref<32x4xbf16, #tpu.memory_space<vmem>>, %arg4: memref<32x1xf32, #tpu.memory_space<vmem>>, %arg5: memref<1x32x256xbf16, #tpu.memory_space<vmem>>) attributes {dimension_semantics = [#tpu.dimension_semantics<parallel>, #tpu.dimension_semantics<parallel>], iteration_bounds = array<i64: 2, 1>, scalar_prefetch = 0 : i64, scratch_operands = 0 : i64, tpu.core_type = #tpu.core_type<tc>, window_params = [{transform_indices = @transform_0, window_bounds = array<i64: 1, 4, 256>}, {pipeline_mode = #tpu.pipeline_mode<synchronous>, transform_indices = @transform_1, window_bounds = array<i64: 32, 4>}, {pipeline_mode = #tpu.pipeline_mode<synchronous>, transform_indices = @transform_2, window_bounds = array<i64: 32, 1>}, {transform_indices = @transform_3, window_bounds = array<i64: 1, 32, 256>}]} {
    %c0 = arith.constant 0 : index
    %c0_0 = arith.constant 0 : index
    %c0_1 = arith.constant 0 : index
    %0 = vector.load %arg2[%c0, %c0_0, %c0_1] : memref<1x4x256xbf16, #tpu.memory_space<vmem>>, vector<1x4x256xbf16>
    %1 = vector.shape_cast %0 : vector<1x4x256xbf16> to vector<4x256xbf16>
    %c0_2 = arith.constant 0 : index
    %c0_3 = arith.constant 0 : index
    %2 = vector.load %arg3[%c0_2, %c0_3] : memref<32x4xbf16, #tpu.memory_space<vmem>>, vector<32x4xbf16>
    %cst = arith.constant dense<0.000000e+00> : vector<32x256xf32>
    %3 = tpu.matmul %2, %1, %cst {dimension_numbers = #tpu.dot_dimension_numbers<[1], [0], [0], [1], [0, 0, 1, 1], [], []>} : vector<32x4xbf16>, vector<4x256xbf16>, vector<32x256xf32> -> vector<32x256xf32>
    %c0_4 = arith.constant 0 : index
    %c0_5 = arith.constant 0 : index
    %4 = vector.load %arg4[%c0_4, %c0_5] : memref<32x1xf32, #tpu.memory_space<vmem>>, vector<32x1xf32>
    %5 = vector.broadcast %4 : vector<32x1xf32> to vector<32x256xf32>
    %6 = arith.addf %3, %5 : vector<32x256xf32>
    %7 = arith.truncf %6 : vector<32x256xf32> to vector<32x256xbf16>
    %c0_6 = arith.constant 0 : index
    %c0_7 = arith.constant 0 : index
    %c0_8 = arith.constant 0 : index
    %8 = vector.load %arg5[%c0_6, %c0_7, %c0_8] : memref<1x32x256xbf16, #tpu.memory_space<vmem>>, vector<1x32x256xbf16>
    %9 = vector.shape_cast %8 : vector<1x32x256xbf16> to vector<32x256xbf16>
    %10 = vector.shape_cast %7 : vector<32x256xbf16> to vector<1x32x256xbf16>
    tpu.vector_store %arg5[%c0_6, %c0_7, %c0_8], %10 {strides = array<i32>} : memref<1x32x256xbf16, #tpu.memory_space<vmem>>, vector<1x32x256xbf16>,
    return
  }
  func.func @transform_0(%arg0: i32, %arg1: i32) -> (i32, i32, i32) {
    %c0_i32 = arith.constant 0 : i32
    %c0_i32_0 = arith.constant 0 : i32
    return %arg0, %c0_i32, %arg1 : i32, i32, i32
  }
  func.func @transform_1(%arg0: i32, %arg1: i32) -> (i32, i32) {
    %c0_i32 = arith.constant 0 : i32
    %c0_i32_0 = arith.constant 0 : i32
    %c0_i32_1 = arith.constant 0 : i32
    return %c0_i32, %c0_i32_0 : i32, i32
  }
  func.func @transform_2(%arg0: i32, %arg1: i32) -> (i32, i32) {
    %c0_i32 = arith.constant 0 : i32
    %c0_i32_0 = arith.constant 0 : i32
    %c0_i32_1 = arith.constant 0 : i32
    return %c0_i32, %c0_i32_0 : i32, i32
  }
  func.func @transform_3(%arg0: i32, %arg1: i32) -> (i32, i32, i32) {
    %c0_i32 = arith.constant 0 : i32
    %c0_i32_0 = arith.constant 0 : i32
    return %arg0, %c0_i32, %arg1 : i32, i32, i32
  }
}

</mosaic_0001>

<llo_original>
// kernel: tpu_custom_call.1
$region0: #{tpu_custom_call.1}
  #allocation0 [shape = 'u32[]', space=smem, size = 0x4, offset = 0x4, fixed_abs, tag = 'smem constant byte address 0x4 - core index']
  #allocation1 [shape = 'u32[144,128]{1,0:T(1,128)}', space=vmem, size = 0x12000, scoped, tag = 'internal scratch']
  %s0 = inlined_call_operand.vmem [shape: bf16[2,4,256], index: 0, kind: input, shape index: {}]
  %s1 = inlined_call_operand.vmem [shape: bf16[32,4], index: 1, kind: input, shape index: {}]
  %s2 = inlined_call_operand.vmem [shape: f32[32,1], index: 2, kind: input, shape index: {}]
  %s3 = inlined_call_operand.hbm [shape: bf16[2,32,256], index: 3, kind: output, shape index: {}]
  %s4 = sld [smem:[#allocation0]]
  $region45: #{tpu_custom_call.1} parent=0
    _
  %s6 = ssub.s32 1, %s4
  %s7 = scalar_select 0, %s6, %s4
  $region1: #{tpu_custom_call.1} parent=0
    #allocation2 [shape = 'u8[32768]{0}', space=vmem, size = 0x8000, scoped, tag = 'output window, operand 0']
    #allocation3 [shape = 's32[2]{0}', space=sflag, size = 0x8, scoped, tag = 'scoped memory for tpu_custom_call.1']
    %8 = vsyncpa [#allocation3], 0
    %s9 = scalar_lea.sflag [#allocation3], 1
    %10 = vsyncpa %s9, 0
    loop: start=0, step=1, limit=4
    $region2: #{tpu_custom_call.1} parent=1 // loop_pre_header
      _
    $region3: #{tpu_custom_call.1} parent=1 // loop_header
      %s12 = sphi 0, %s16
      %p13 = scmp.ge.s32.totalorder %s12, 4
      %s19 = sphi 0, %s31
      %s20 = sphi 0, %s27
      %s21 = sphi 0, %s19
      %s22 = sphi 0, %s20
      %s23 = sphi 0, %s21
      %s24 = sphi 0, %s22
      %s36 = sphi 0, %s38
      %s39 = sphi 0, %s36
      %s40 = sphi 0, %s39
      %s56 = sphi 0, %s40
      %s60 = sphi 0, %s60
      %s62 = sphi 0, %s60
      %s63 = sphi 0, %s62
      %s77 = sphi 0, %s63
      %s81 = sphi 0, %s81
      %s83 = sphi 0, %s81
      %s84 = sphi 0, %s83
      %s98 = sphi 0, %s84
      %s106 = sphi 0, %s108
      %s109 = sphi 0, %s106
      %s110 = sphi 0, %s109
      %s126 = sphi 0, %s110
    $region4: #{tpu_custom_call.1} parent=1 // loop_header_branch
      %15 = sbr.rel (%p13) target = $region8
    $region5: #{tpu_custom_call.1} parent=1 // loop_body
      %s17 = ssub.s32 %s12, 1
      %s18 = ssub.s32 %s12, 2
      %s25 = sadd.s32 1, %s20
      %p26 = scmp.ge.s32.totalorder %s25, 1
      %s27 = scalar_select %p26, 0, %s25
      %s28 = sadd.s32 1, %s19
      %s29 = scalar_select %p26, %s28, %s19
      %p30 = scmp.ge.s32.totalorder %s29, 2
      %s31 = scalar_select %p30, 0, %s29
      %s32 = ssub.s32 %s19, %s31
      %s33 = ssub.s32 %s20, %s27
      %s34 = sor.u32 %s32, %s33
      %p35 = scmp.eq.s32.totalorder %s34, 0
      %s37 = sadd.s32 %s36, 1
      %s38 = scalar_select %p35, %s36, %s37
      %p41 = pneg %p35
      %p42 = scmp.eq.s32.totalorder %s12, 1
      %p43 = por %p41, %p42
      %p44 = scmp.ne.s32.totalorder %s36, %s39
      %p45 = scmp.eq.s32.totalorder %s12, 0
      %p46 = por %p44, %p45
      %p47 = scmp.ne.s32.totalorder %s36, %s39
      %p48 = scmp.eq.s32.totalorder %s17, 1
      %p49 = por %p47, %p48
      %p50 = scmp.ne.s32.totalorder %s39, %s40
      %p51 = scmp.eq.s32.totalorder %s17, 0
      %p52 = por %p50, %p51
      %p53 = scmp.ne.s32.totalorder %s39, %s40
      %p54 = scmp.eq.s32.totalorder %s18, 1
      %p55 = por %p53, %p54
      %p57 = scmp.ne.s32.totalorder %s40, %s56
      %p58 = scmp.eq.s32.totalorder %s18, 0
      %p59 = por %p57, %p58
      %s61 = sadd.s32 %s60, 1
      %p64 = scmp.eq.s32.totalorder %s12, 1
      %p65 = scmp.ne.s32.totalorder %s60, %s62
      %p66 = scmp.eq.s32.totalorder %s12, 0
      %p67 = por %p65, %p66
      %p68 = scmp.ne.s32.totalorder %s60, %s62
      %p69 = scmp.eq.s32.totalorder %s17, 1
      %p70 = por %p68, %p69
      %p71 = scmp.ne.s32.totalorder %s62, %s63
      %p72 = scmp.eq.s32.totalorder %s17, 0
      %p73 = por %p71, %p72
      %p74 = scmp.ne.s32.totalorder %s62, %s63
      %p75 = scmp.eq.s32.totalorder %s18, 1
      %p76 = por %p74, %p75
      %p78 = scmp.ne.s32.totalorder %s63, %s77
      %p79 = scmp.eq.s32.totalorder %s18, 0
      %p80 = por %p78, %p79
      %s82 = sadd.s32 %s81, 1
      %p85 = scmp.eq.s32.totalorder %s12, 1
      %p86 = scmp.ne.s32.totalorder %s81, %s83
      %p87 = scmp.eq.s32.totalorder %s12, 0
      %p88 = por %p86, %p87
      %p89 = scmp.ne.s32.totalorder %s81, %s83
      %p90 = scmp.eq.s32.totalorder %s17, 1
      %p91 = por %p89, %p90
      %p92 = scmp.ne.s32.totalorder %s83, %s84
      %p93 = scmp.eq.s32.totalorder %s17, 0
      %p94 = por %p92, %p93
      %p95 = scmp.ne.s32.totalorder %s83, %s84
      %p96 = scmp.eq.s32.totalorder %s18, 1
      %p97 = por %p95, %p96
      %p99 = scmp.ne.s32.totalorder %s84, %s98
      %p100 = scmp.eq.s32.totalorder %s18, 0
      %p101 = por %p99, %p100
      %s102 = ssub.s32 %s19, %s31
      %s103 = ssub.s32 %s20, %s27
      %s104 = sor.u32 %s102, %s103
      %p105 = scmp.eq.s32.totalorder %s104, 0
      %s107 = sadd.s32 %s106, 1
      %s108 = scalar_select %p105, %s106, %s107
      %p111 = pneg %p105
      %p112 = scmp.eq.s32.totalorder %s12, 1
      %p113 = por %p111, %p112
      %p114 = scmp.ne.s32.totalorder %s106, %s109
      %p115 = scmp.eq.s32.totalorder %s12, 0
      %p116 = por %p114, %p115
      %p117 = scmp.ne.s32.totalorder %s106, %s109
      %p118 = scmp.eq.s32.totalorder %s17, 1
      %p119 = por %p117, %p118
      %p120 = scmp.ne.s32.totalorder %s109, %s110
      %p121 = scmp.eq.s32.totalorder %s17, 0
      %p122 = por %p120, %p121
      %p123 = scmp.ne.s32.totalorder %s109, %s110
      %p124 = scmp.eq.s32.totalorder %s18, 1
      %p125 = por %p123, %p124
      %p127 = scmp.ne.s32.totalorder %s110, %s126
      %p128 = scmp.eq.s32.totalorder %s18, 0
      %p129 = por %p127, %p128
      %p130 = scmp.le.s32.totalorder 1, %s12
      %p131 = scmp.lt.s32.totalorder %s12, 3
      %p132 = pnand %p130, %p131
      %p133 = pneg %p132
      // Predicated region
      $region9: #{tpu_custom_call.1} parent=5 // pred_check
        _
      $region10: #{tpu_custom_call.1} parent=5 // pred_check_branch
        %135 = sbr.rel (%p132) target = $region12
      $region11: #{tpu_custom_call.1} parent=5 // pred_region
        %s136 = ssub.s32 %s12, 1
        // Predicated region
        $region13: #{tpu_custom_call.1} parent=11 // pred_check
          %p137 = pneg %p73
        $region14: #{tpu_custom_call.1} parent=11 // pred_check_branch
          %139 = sbr.rel (%p137) target = $region16
        $region15: #{tpu_custom_call.1} parent=11 // pred_region
          _
        $region16: #{tpu_custom_call.1} parent=11 // pred_fallthru
          _
        // Predicated region
        $region17: #{tpu_custom_call.1} parent=11 // pred_check
          %p140 = pneg %p94
        $region18: #{tpu_custom_call.1} parent=11 // pred_check_branch
          %142 = sbr.rel (%p140) target = $region20
        $region19: #{tpu_custom_call.1} parent=11 // pred_region
          _
        $region20: #{tpu_custom_call.1} parent=11 // pred_fallthru
          _
      $region12: #{tpu_custom_call.1} parent=5 // pred_fallthru
        _
      %p143 = scmp.lt.s32.totalorder %s12, 2
      // Predicated region
      $region21: #{tpu_custom_call.1} parent=5 // pred_check
        %p144 = pneg %p143
      $region22: #{tpu_custom_call.1} parent=5 // pred_check_branch
        %146 = sbr.rel (%p144) target = $region24
      $region23: #{tpu_custom_call.1} parent=5 // pred_region
        // Predicated region
        $region25: #{tpu_custom_call.1} parent=23 // pred_check
          %p147 = pneg %p46
        $region26: #{tpu_custom_call.1} parent=23 // pred_check_branch
          %149 = sbr.rel (%p147) target = $region28
        $region27: #{tpu_custom_call.1} parent=23 // pred_region
          %s150 = smul.u32 2, %s20
          %p151 = scmp.lt.s32.totalorder %s19, 1
          %s152 = scalar_select %p151, %s19, 1
          %p153 = scmp.lt.s32.totalorder %s150, 1
          %s154 = scalar_select %p153, %s150, 1
          %s155 = smul.addr %s152, 2
          %s156 = sadd.s32 %s154, %s155
          %s157 = smul.addr %s156, 2
          %s158 = scalar_lea.vmem %s0, %s157
          %s159 = smul.u32 2, %s20
        $region28: #{tpu_custom_call.1} parent=23 // pred_fallthru
          _
      $region24: #{tpu_custom_call.1} parent=5 // pred_fallthru
        _
      %p160 = scmp.le.s32.totalorder 1, %s12
      %p161 = scmp.lt.s32.totalorder %s12, 3
      %p162 = pnand %p160, %p161
      %p163 = pneg %p162
      // Predicated region
      $region29: #{tpu_custom_call.1} parent=5 // pred_check
        _
      $region30: #{tpu_custom_call.1} parent=5 // pred_check_branch
        %165 = sbr.rel (%p162) target = $region32
      $region31: #{tpu_custom_call.1} parent=5 // pred_region
        %s166 = ssub.s32 %s12, 1
        %s167 = smul.u32 2, %s22
        %p168 = scmp.lt.s32.totalorder %s21, 1
        %s169 = scalar_select %p168, %s21, 1
        %p170 = scmp.lt.s32.totalorder %s167, 1
        %s171 = scalar_select %p170, %s167, 1
        %s172 = smul.addr %s169, 2
        %s173 = sadd.s32 %s171, %s172
        %s174 = smul.addr %s173, 2
        %s175 = scalar_lea.vmem %s0, %s174
        %p176 = pneg %p52
        %p177 = pneg %p49
        %p178 = pneg %p73
        %p179 = pneg %p70
        %p180 = pneg %p94
        %p181 = pneg %p91
        %p182 = pneg %p122
        %p183 = pneg %p119
        %s184 = sand.u32 %s109, 1
        %s185 = scalar_lea.sflag [#allocation3], %s184
        %s186 = sand.u32 %s109, 1
        %s187 = smul.addr %s186, 32
        %s188 = scalar_lea.vmem [#allocation2], %s187
        %s189 = smul.u32 2, %s22
        %p190 = scmp.lt.s32.totalorder %s21, 1
        %s191 = scalar_select %p190, %s21, 1
        %p192 = scmp.lt.s32.totalorder %s189, 1
        %s193 = scalar_select %p192, %s189, 1
        %s194 = smul.addr %s191, 2
        %s195 = sadd.s32 %s193, %s194
        %s196 = smul.addr %s195, 2
        %s197 = scalar_lea.vmem %s0, %s196
        %s198 = smul.u32 2, %s22
        %s199 = smul.u32 2, %s22
        %v201 = vld [vmem:[%s197] sm:$0xf]
        %v202 = vld [vmem:[%s1] sm:$0xf]
        %v203 = vld [vmem:[%s1 + $0x4] sm:$0xf]
        %v204 = vld [vmem:[%s1 + $0x8] sm:$0xf]
        %v205 = vld [vmem:[%s1 + $0xc] sm:$0xf]
        %v206 = vld [vmem:[%s2] sm:$0xff]
        %v207 = vld [vmem:[%s2 + $0x8] sm:$0xff]
        %v208 = vld [vmem:[%s2 + $0x10] sm:$0xff]
        %v209 = vld [vmem:[%s2 + $0x18] sm:$0xff]
        %211 = vset.pattern.permute.xlu0 0
        %212 = vperm.xlu0 %211, %v206
        %v213 = vpop.permute.xlu0 %212
        %216 = vset.pattern.permute.xlu0 0
        %217 = vperm.xlu0 %216, %v207
        %v218 = vpop.permute.xlu0 %217
        %221 = vset.pattern.permute.xlu0 0
        %222 = vperm.xlu0 %221, %v208
        %v223 = vpop.permute.xlu0 %222
        %226 = vset.pattern.permute.xlu0 0
        %227 = vperm.xlu0 %226, %v209
        %v228 = vpop.permute.xlu0 %227
        %v234 = vunpack.c.l.b16 %v202
        %v235 = vunpack.c.l.b16 %v203
        %v236 = vunpack.c.l.b16 %v204
        %v237 = vunpack.c.l.b16 %v205
        %v238 = vpack.c.b16 %v235, %v234
        %v239 = vpack.c.b16 %v237, %v236
        %v242 = vunpack.c.l.s4 1983009808
        %v243 = vunpack.c.0.s8 %v242
        %v244 = vlaneseq
        %v245 = vshrl.u32 %v244, 7
        %v246 = vsub.s32 %v243, %v245
        %v247 = vrot.slane %v201, %v246
        %v248 = vcombine.high %v247, %v247
        %vm249 = vcmask 31744
        %v251 = vsel %vm249, %v238, 0
        %v254 = vsel %vm249, %v239, 0
        %vm256 = vcmask 1041408
        %v258 = vsel %vm256, %v247, 0
        %v261 = vsel %vm256, %v248, 0
        %263 = vmatprep.subr.bf16.mxu0 0
        %264 = vmatpush1.bf16.msra.mxu0 0
        %265 = vmatprep.subr.bf16.mxu0 0
        %266 = vmatpush1.bf16.msra.mxu0 0
        %267 = vmatprep.subr.bf16.mxu0 0
        %268 = vmatpush1.bf16.msra.mxu0 0
        %269 = vmatprep.subr.bf16.mxu0 0
        %270 = vmatpush1.bf16.msra.mxu0 0
        %271 = vmatprep.subr.bf16.mxu0 0
        %272 = vmatpush1.bf16.msra.mxu0 0
        %273 = vmatprep.subr.bf16.mxu0 0
        %274 = vmatpush1.bf16.msra.mxu0 0
        %275 = vmatprep.subr.bf16.mxu0 0
        %276 = vmatpush1.bf16.msra.mxu0 0
        %277 = vmatprep.subr.bf16.mxu0 %v261
        %278 = vmatpush1.bf16.msra.mxu0 %v258
        %279 = vmatprep.subr.bf16.mxu0 0
        %280 = vmatpush2.bf16.msra.mxu0 0
        %281 = vmatprep.subr.bf16.mxu0 0
        %282 = vmatpush2.bf16.msra.mxu0 0
        %283 = vmatprep.subr.bf16.mxu0 0
        %284 = vmatpush2.bf16.msra.mxu0 0
        %285 = vmatprep.subr.bf16.mxu0 0
        %286 = vmatpush2.bf16.msra.mxu0 0
        %287 = vmatprep.subr.bf16.mxu0 0
        %288 = vmatpush2.bf16.msra.mxu0 0
        %289 = vmatprep.subr.bf16.mxu0 0
        %290 = vmatpush2.bf16.msra.mxu0 0
        %291 = vmatprep.subr.bf16.mxu0 0
        %292 = vmatpush2.bf16.msra.mxu0 0
        %293 = vmatprep.subr.bf16.mxu0 0
        %294 = vmatpush2.bf16.msra.mxu0 0
        %295 = vmatprep.mubr.bf16.mxu0 0
        %296 = vmatmul.mubr.bf16.gmra.mxu0 %v251
        %v297 = vpop.f32.mrf.mxu0
        %v298 = vadd.f32 %v213, %v297
        %v299 = vpop.f32.mrf.mxu0
        %v300 = vadd.f32 %v213, %v299
        %v301 = vpop.f32.mrf.mxu0
        %v302 = vadd.f32 %v218, %v301
        %v303 = vpop.f32.mrf.mxu0
        %v304 = vadd.f32 %v218, %v303
        %305 = vmatprep.mubr.bf16.mxu0 0
        %306 = vmatmul.mubr.bf16.gmra.mxu0 %v254
        %v307 = vpop.f32.mrf.mxu0
        %v308 = vadd.f32 %v223, %v307
        %v309 = vpop.f32.mrf.mxu0
        %v310 = vadd.f32 %v223, %v309
        %v311 = vpop.f32.mrf.mxu0
        %v312 = vadd.f32 %v228, %v311
        %v313 = vpop.f32.mrf.mxu0
        %v314 = vadd.f32 %v228, %v313
        %315 = vdwg.mxu0
        %v316 = vpack.c.bf16 %v302, %v298
        %v317 = vpack.c.bf16 %v304, %v300
        %v318 = vpack.c.bf16 %v312, %v308
        %v319 = vpack.c.bf16 %v314, %v310
        %v324 = vunpack.c.l.b16 %v316
        %v325 = vunpack.c.l.b16 %v317
        %v326 = vunpack.c.h.b16 %v316
        %v327 = vunpack.c.h.b16 %v317
        %v328 = vunpack.c.l.b16 %v318
        %v329 = vunpack.c.l.b16 %v319
        %v330 = vunpack.c.h.b16 %v318
        %v331 = vunpack.c.h.b16 %v319
        %v332 = vpack.c.b16 %v325, %v324
        %v333 = vpack.c.b16 %v327, %v326
        %v334 = vpack.c.b16 %v329, %v328
        %v335 = vpack.c.b16 %v331, %v330
        %340 = vst [vmem:[%s188] sm:$0xff] %v332
        %341 = vst [vmem:[%s188 + $0x8] sm:$0xff] %v333
        %342 = vst [vmem:[%s188 + $0x10] sm:$0xff] %v334
        %343 = vst [vmem:[%s188 + $0x18] sm:$0xff] %v335
        %s344 = sand.u32 %s109, 1
        %s345 = scalar_lea.sflag [#allocation3], %s344
        %s346 = sand.u32 %s109, 1
        %s347 = smul.addr %s346, 32
        %s348 = scalar_lea.vmem [#allocation2], %s347
        // Predicated region
        $region33: #{tpu_custom_call.1} parent=31 // pred_check
          %p349 = pneg %p119
        $region34: #{tpu_custom_call.1} parent=31 // pred_check_branch
          %351 = sbr.rel (%p349) target = $region36
        $region35: #{tpu_custom_call.1} parent=31 // pred_region
          %s352 = smul.u32 2, %s22
          %s354 = ssub.s32 512, 512
          %355 = vsyncadd %s345, %s354
          %s356 = smul.addr %s21, 8
          %s357 = sadd.s32 %s352, %s356
          %s358 = smul.addr %s357, 64
          %s359 = scalar_lea.hbm %s3, %s358
          %s360 = sshll.u32 %s348, 4
          %s361 = int_to_ptr.vmem [resolvable:$true] %s360
          %366 = dma.vmem_to_hbm [thread:$0]  %s361, 512, %s359, %s345, 128, 128, 8
        $region36: #{tpu_custom_call.1} parent=31 // pred_fallthru
          _
      $region32: #{tpu_custom_call.1} parent=5 // pred_fallthru
        _
      %p367 = scmp.le.s32.totalorder 2, %s12
      // Predicated region
      $region37: #{tpu_custom_call.1} parent=5 // pred_check
        %p368 = pneg %p367
      $region38: #{tpu_custom_call.1} parent=5 // pred_check_branch
        %370 = sbr.rel (%p368) target = $region40
      $region39: #{tpu_custom_call.1} parent=5 // pred_region
        %s371 = ssub.s32 %s12, 2
        // Predicated region
        $region41: #{tpu_custom_call.1} parent=39 // pred_check
          %p372 = pneg %p125
        $region42: #{tpu_custom_call.1} parent=39 // pred_check_branch
          %374 = sbr.rel (%p372) target = $region44
        $region43: #{tpu_custom_call.1} parent=39 // pred_region
          %s375 = sand.u32 %s110, 1
          %s376 = scalar_lea.sflag [#allocation3], %s375
          %s377 = sand.u32 %s110, 1
          %s378 = smul.addr %s377, 32
          %s379 = scalar_lea.vmem [#allocation2], %s378
          %380 = dma.done %s376, 512
        $region44: #{tpu_custom_call.1} parent=39 // pred_fallthru
          _
      $region40: #{tpu_custom_call.1} parent=5 // pred_fallthru
        _
    $region6: #{tpu_custom_call.1} parent=1 // loop_footer
      %s16 = sadd.s32 1, %s12
    $region7: #{tpu_custom_call.1} parent=1 // loop_footer_branch
      %11 = sbr.rel target = $region3
    $region8: #{tpu_custom_call.1} parent=1 // loop_exit
      _
    %381 = vsyncpa [#allocation3], 1
    %s382 = scalar_lea.sflag [#allocation3], 1
    %383 = vsyncpa %s382, 1

</llo_original>
